<compile_context>
chip_gen: v7x
topology: tpu7x:2x2x1
jax: 0.10.0
libtpu: 0.0.40
codegen_flags: <defaults>
</compile_context>

<pallas_src>
import functools

import jax
import jax.numpy as jnp
from jax import lax
from jax.experimental import pallas as pl
from jax.experimental.pallas import tpu as pltpu

EPS = 1e-6
LANES = 128                              # vreg lane width
TARGET_BLOCK_BYTES = 2 * 1024 * 1024     # ~2 MiB of input bytes per block/step
MIN_GRID_STEPS = 4                       # keep >=2 steps per TC for v7x megacore


def _round_up(v, m):
    return (v + m - 1) // m * m


def _charbonnier_tile_kernel(x_ref, y_ref, o_ref, *, rem_rows):
    """One row-tile: o_ref[0] <- (1, 128) partial sum of sqrt((x-y)^2 + eps)."""
    i = pl.program_id(0)
    last = pl.num_programs(0) - 1

    x = x_ref[...].astype(jnp.float32)
    y = y_ref[...].astype(jnp.float32)
    diff = x - y
    err = jnp.sqrt(diff * diff + jnp.float32(EPS))

    def tile_partial(e):
        # (tile_rows,128) -> (tile_rows//8, 8, 128) -> (8,128)  [VALU adds]
        # -> (1,128) cross-sublane reduce [XLU slot, idle in this kernel].
        t = e.reshape(e.shape[0] // 8, 8, LANES)
        p8 = jnp.sum(t, axis=0)
        return jnp.sum(p8, axis=0, keepdims=True)

    @pl.when(i != last)
    def _full_tile():
        o_ref[0] = tile_partial(err)

    @pl.when(i == last)
    def _masked_tile():
        # Only the last (possibly partially out-of-bounds) tile pays for the
        # row mask; jnp.where is a true select so stale VMEM never leaks in.
        r = lax.broadcasted_iota(jnp.int32, err.shape, 0)
        o_ref[0] = tile_partial(jnp.where(r < rem_rows, err, jnp.float32(0.0)))


def _pick_tile_rows(rows, itemsize):
    """Tile row count: ~2 MiB of input bytes per block, capped for small inputs."""
    target = max(8, (TARGET_BLOCK_BYTES // (LANES * itemsize)) // 8 * 8)
    # Keep n_tiles >= MIN_GRID_STEPS when possible so megacore/pipelining has
    # multiple steps to work with.
    cap = max(8, _round_up(pl.cdiv(rows, MIN_GRID_STEPS), 8))
    tile_rows = min(target, cap, _round_up(rows, 8))
    return max(8, tile_rows)


def l1_charbonnier_loss(x, y):
    """Pallas TPU L1 Charbonnier loss. Returns an f32 scalar."""
    assert x.shape == y.shape, (x.shape, y.shape)
    total = x.size
    assert total > 0

    xf = jnp.ravel(x)
    yf = jnp.ravel(y)

    main_total = (total // LANES) * LANES    # lane-aligned prefix (pure reshape)
    tail = total - main_total

    # <128-element tail handled in the wrapper -> no jnp.pad full-array copy.
    if tail:
        xt = xf[main_total:].astype(jnp.float32)
        yt = yf[main_total:].astype(jnp.float32)
        dt = xt - yt
        tail_sum = jnp.sum(jnp.sqrt(dt * dt + jnp.float32(EPS)))
    else:
        tail_sum = jnp.float32(0.0)

    if main_total == 0:
        # Fewer than 128 elements total: nothing for the kernel to do.
        return tail_sum / jnp.float32(total)

    rows = main_total // LANES
    itemsize = jnp.dtype(x.dtype).itemsize
    tile_rows = _pick_tile_rows(rows, itemsize)
    n_tiles = pl.cdiv(rows, tile_rows)
    rem_rows = rows - (n_tiles - 1) * tile_rows   # valid rows in the last tile

    x2d = (xf[:main_total] if tail else xf).reshape(rows, LANES)
    y2d = (yf[:main_total] if tail else yf).reshape(rows, LANES)

    kernel = functools.partial(_charbonnier_tile_kernel, rem_rows=rem_rows)

    cost = pl.CostEstimate(
        flops=3 * main_total,                 # sub, mul, add
        transcendentals=main_total,           # sqrt
        bytes_accessed=2 * main_total * itemsize + n_tiles * LANES * 4,
    )

    partials = pl.pallas_call(
        kernel,
        out_shape=jax.ShapeDtypeStruct((n_tiles, 1, LANES), jnp.float32),
        grid_spec=pltpu.PrefetchScalarGridSpec(
            num_scalar_prefetch=0,
            grid=(n_tiles,),
            in_specs=[
                pl.BlockSpec((tile_rows, LANES), lambda i: (i, 0)),
                pl.BlockSpec((tile_rows, LANES), lambda i: (i, 0)),
            ],
            out_specs=pl.BlockSpec((1, 1, LANES), lambda i: (i, 0, 0)),
        ),
        compiler_params=pltpu.CompilerParams(
            # No carried state across tiles -> fully parallel grid axis; lets
            # v7x megacore shard the row-tile loop across its 2 TensorCores.
            dimension_semantics=("parallel",),
            # ~2 MiB/input block x 2 inputs x 2 pipeline buffers = ~8 MiB;
            # raise the scoped-VMEM limit so v5e's 16 MiB default has headroom.
            vmem_limit_bytes=32 * 1024 * 1024,
        ),
        cost_estimate=cost,
    )(x2d, y2d)

    return (jnp.sum(partials) + tail_sum) / jnp.float32(total)


if __name__ == "__main__":
    key = jax.random.PRNGKey(0)
    kx, ky = jax.random.split(key)
    # NCHW-shaped synthetic inputs (batch=2, channels=4, spatial=16x16)
    x = jax.random.normal(kx, (2, 4, 16, 16), dtype=jnp.float32)
    y = jax.random.normal(ky, (2, 4, 16, 16), dtype=jnp.float32)

    loss = jax.block_until_ready(l1_charbonnier_loss(x, y))

    # Pure-JAX reference check
    ref = jnp.mean(jnp.sqrt((x - y) ** 2 + EPS))
    assert jnp.allclose(loss, ref, rtol=1e-5, atol=1e-6), (loss, ref)

    print("KERNEL_OK")
</pallas_src>

<mosaic_0001>
module attributes {stable_mosaic.version = 11 : i64} {
  func.func @_charbonnier_tile_kernel(%arg0: i32, %arg1: memref<8x128xf32, #tpu.memory_space<vmem>>, %arg2: memref<8x128xf32, #tpu.memory_space<vmem>>, %arg3: memref<1x1x128xf32, #tpu.memory_space<vmem>>) attributes {dimension_semantics = [#tpu.dimension_semantics<parallel>], iteration_bounds = array<i64: 2>, scalar_prefetch = 0 : i64, scratch_operands = 0 : i64, tpu.core_type = #tpu.core_type<tc>, window_params = [{transform_indices = @transform_0, window_bounds = array<i64: 8, 128>}, {transform_indices = @transform_1, window_bounds = array<i64: 8, 128>}, {transform_indices = @transform_2, window_bounds = array<i64: 1, 1, 128>}]} {
    %c0 = arith.constant 0 : index
    %c0_0 = arith.constant 0 : index
    %0 = vector.load %arg1[%c0, %c0_0] : memref<8x128xf32, #tpu.memory_space<vmem>>, vector<8x128xf32>
    %c0_1 = arith.constant 0 : index
    %c0_2 = arith.constant 0 : index
    %1 = vector.load %arg2[%c0_1, %c0_2] : memref<8x128xf32, #tpu.memory_space<vmem>>, vector<8x128xf32>
    %2 = arith.subf %0, %1 : vector<8x128xf32>
    %3 = arith.mulf %2, %2 : vector<8x128xf32>
    %cst = arith.constant 9.99999997E-7 : f32
    %4 = vector.broadcast %cst : f32 to vector<8x128xf32>
    %5 = arith.addf %3, %4 : vector<8x128xf32>
    %6 = math.sqrt %5 : vector<8x128xf32>
    %c1_i32 = arith.constant 1 : i32
    %7 = arith.cmpi ne, %arg0, %c1_i32 : i32
    %8 = arith.extui %7 : i1 to i32
    %c0_i32 = arith.constant 0 : i32
    %9 = arith.cmpi ne, %8, %c0_i32 : i32
    scf.if %9 {
      %13 = vector.shape_cast %6 : vector<8x128xf32> to vector<1x8x128xf32>
      %cst_5 = arith.constant dense<0.000000e+00> : vector<8x128xf32>
      %14 = vector.multi_reduction <add>, %13, %cst_5 [0] : vector<1x8x128xf32> to vector<8x128xf32>
      %cst_6 = arith.constant dense<0.000000e+00> : vector<128xf32>
      %15 = vector.multi_reduction <add>, %14, %cst_6 [0] : vector<8x128xf32> to vector<128xf32>
      %16 = vector.shape_cast %15 : vector<128xf32> to vector<1x128xf32>
      %c0_7 = arith.constant 0 : index
      %c0_8 = arith.constant 0 : index
      %c0_9 = arith.constant 0 : index
      %17 = vector.load %arg3[%c0_7, %c0_8, %c0_9] : memref<1x1x128xf32, #tpu.memory_space<vmem>>, vector<1x1x128xf32>
      %18 = vector.shape_cast %17 : vector<1x1x128xf32> to vector<1x128xf32>
      %19 = vector.shape_cast %16 : vector<1x128xf32> to vector<1x1x128xf32>
      tpu.vector_store %arg3[%c0_7, %c0_8, %c0_9], %19 {strides = array<i32>} : memref<1x1x128xf32, #tpu.memory_space<vmem>>, vector<1x1x128xf32>,
    } else {
    }
    %c1_i32_3 = arith.constant 1 : i32
    %10 = arith.cmpi eq, %arg0, %c1_i32_3 : i32
    %11 = arith.extui %10 : i1 to i32
    %c0_i32_4 = arith.constant 0 : i32
    %12 = arith.cmpi ne, %11, %c0_i32_4 : i32
    scf.if %12 {
      %13 = tpu.iota {dimensions = array<i32: 0>} : vector<8x128xi32>
      %c8_i32 = arith.constant 8 : i32
      %14 = vector.broadcast %c8_i32 : i32 to vector<8x128xi32>
      %15 = arith.cmpi slt, %13, %14 : vector<8x128xi32>
      %cst_5 = arith.constant 0.000000e+00 : f32
      %16 = vector.broadcast %cst_5 : f32 to vector<8x128xf32>
      %17 = arith.select %15, %6, %16 : vector<8x128xi1>, vector<8x128xf32>
      %18 = vector.shape_cast %17 : vector<8x128xf32> to vector<1x8x128xf32>
      %cst_6 = arith.constant dense<0.000000e+00> : vector<8x128xf32>
      %19 = vector.multi_reduction <add>, %18, %cst_6 [0] : vector<1x8x128xf32> to vector<8x128xf32>
      %cst_7 = arith.constant dense<0.000000e+00> : vector<128xf32>
      %20 = vector.multi_reduction <add>, %19, %cst_7 [0] : vector<8x128xf32> to vector<128xf32>
      %21 = vector.shape_cast %20 : vector<128xf32> to vector<1x128xf32>
      %c0_8 = arith.constant 0 : index
      %c0_9 = arith.constant 0 : index
      %c0_10 = arith.constant 0 : index
      %22 = vector.load %arg3[%c0_8, %c0_9, %c0_10] : memref<1x1x128xf32, #tpu.memory_space<vmem>>, vector<1x1x128xf32>
      %23 = vector.shape_cast %22 : vector<1x1x128xf32> to vector<1x128xf32>
      %24 = vector.shape_cast %21 : vector<1x128xf32> to vector<1x1x128xf32>
      tpu.vector_store %arg3[%c0_8, %c0_9, %c0_10], %24 {strides = array<i32>} : memref<1x1x128xf32, #tpu.memory_space<vmem>>, vector<1x1x128xf32>,
    } else {
    }
    return
  }
  func.func @transform_0(%arg0: i32) -> (i32, i32) {
    %c0_i32 = arith.constant 0 : i32
    %c0_i32_0 = arith.constant 0 : i32
    return %arg0, %c0_i32 : i32, i32
  }
  func.func @transform_1(%arg0: i32) -> (i32, i32) {
    %c0_i32 = arith.constant 0 : i32
    %c0_i32_0 = arith.constant 0 : i32
    return %arg0, %c0_i32 : i32, i32
  }
  func.func @transform_2(%arg0: i32) -> (i32, i32, i32) {
    %c0_i32 = arith.constant 0 : i32
    %c0_i32_0 = arith.constant 0 : i32
    %c0_i32_1 = arith.constant 0 : i32
    return %arg0, %c0_i32, %c0_i32_0 : i32, i32, i32
  }
}

</mosaic_0001>

<llo_original>
// kernel: tpu_custom_call.1
$region0: #{tpu_custom_call.1}
  #allocation0 [shape = 'u32[]', space=smem, size = 0x4, offset = 0x4, fixed_abs, tag = 'smem constant byte address 0x4 - core index']
  #allocation1 [shape = 'u32[144,128]{1,0:T(1,128)}', space=vmem, size = 0x12000, scoped, tag = 'internal scratch']
  %s0 = inlined_call_operand.hbm [shape: f32[16,128], index: 0, kind: input, shape index: {}]
  %s1 = inlined_call_operand.hbm [shape: f32[16,128], index: 1, kind: input, shape index: {}]
  %s2 = inlined_call_operand.hbm [shape: f32[2,1,128], index: 2, kind: output, shape index: {}]
  %s3 = sld [smem:[#allocation0]]
  $region57: #{tpu_custom_call.1} parent=0
    _
  %s5 = ssub.s32 1, %s3
  %s6 = scalar_select 0, %s5, %s3
  $region1: #{tpu_custom_call.1} parent=0
    #allocation2 [shape = 'u8[8192]{0}', space=vmem, size = 0x2000, scoped, tag = 'input window, operand 0']
    #allocation3 [shape = 's32[2]{0}', space=sflag, size = 0x8, scoped, tag = 'scoped memory for tpu_custom_call.1']
    #allocation4 [shape = 's32[2]{0}', space=sflag, size = 0x8, scoped, tag = 'scoped memory for tpu_custom_call.1']
    #allocation5 [shape = 'u8[8192]{0}', space=vmem, size = 0x2000, scoped, tag = 'input window, operand 1']
    #allocation6 [shape = 's32[2]{0}', space=sflag, size = 0x8, scoped, tag = 'scoped memory for tpu_custom_call.1']
    #allocation7 [shape = 'u8[1024]{0}', space=vmem, size = 0x400, scoped, tag = 'output window, operand 0']
    %7 = vsyncpa [#allocation3], 0
    %s8 = scalar_lea.sflag [#allocation3], 1
    %9 = vsyncpa %s8, 0
    %10 = vsyncpa [#allocation6], 0
    %s11 = scalar_lea.sflag [#allocation6], 1
    %12 = vsyncpa %s11, 0
    %13 = vsyncpa [#allocation4], 0
    %s14 = scalar_lea.sflag [#allocation4], 1
    %15 = vsyncpa %s14, 0
    loop: start=0, step=1, limit=4
    $region2: #{tpu_custom_call.1} parent=1 // loop_pre_header
      _
    $region3: #{tpu_custom_call.1} parent=1 // loop_header
      %s17 = sphi 0, %s21
      %p18 = scmp.ge.s32.totalorder %s17, 4
      %s27 = sphi 0, %s29
      %s30 = sphi 0, %s27
      %s31 = sphi 0, %s30
      %s47 = sphi 0, %s31
      %s53 = sphi 0, %s55
      %s56 = sphi 0, %s53
      %s57 = sphi 0, %s56
      %s73 = sphi 0, %s57
      %s79 = sphi 0, %s81
      %s82 = sphi 0, %s79
      %s83 = sphi 0, %s82
      %s99 = sphi 0, %s83
    $region4: #{tpu_custom_call.1} parent=1 // loop_header_branch
      %20 = sbr.rel (%p18) target = $region8
    $region5: #{tpu_custom_call.1} parent=1 // loop_body
      %s22 = ssub.s32 %s17, 1
      %s23 = ssub.s32 %s17, 2
      %s24 = sadd.s32 %s17, 1
      %s25 = ssub.s32 %s17, %s24
      %p26 = scmp.eq.s32.totalorder %s25, 0
      %s28 = sadd.s32 %s27, 1
      %s29 = scalar_select %p26, %s27, %s28
      %p32 = pneg %p26
      %p33 = scmp.eq.s32.totalorder %s17, 1
      %p34 = por %p32, %p33
      %p35 = scmp.ne.s32.totalorder %s27, %s30
      %p36 = scmp.eq.s32.totalorder %s17, 0
      %p37 = por %p35, %p36
      %p38 = scmp.ne.s32.totalorder %s27, %s30
      %p39 = scmp.eq.s32.totalorder %s22, 1
      %p40 = por %p38, %p39
      %p41 = scmp.ne.s32.totalorder %s30, %s31
      %p42 = scmp.eq.s32.totalorder %s22, 0
      %p43 = por %p41, %p42
      %p44 = scmp.ne.s32.totalorder %s30, %s31
      %p45 = scmp.eq.s32.totalorder %s23, 1
      %p46 = por %p44, %p45
      %p48 = scmp.ne.s32.totalorder %s31, %s47
      %p49 = scmp.eq.s32.totalorder %s23, 0
      %p50 = por %p48, %p49
      %s51 = ssub.s32 %s17, %s24
      %p52 = scmp.eq.s32.totalorder %s51, 0
      %s54 = sadd.s32 %s53, 1
      %s55 = scalar_select %p52, %s53, %s54
      %p58 = pneg %p52
      %p59 = scmp.eq.s32.totalorder %s17, 1
      %p60 = por %p58, %p59
      %p61 = scmp.ne.s32.totalorder %s53, %s56
      %p62 = scmp.eq.s32.totalorder %s17, 0
      %p63 = por %p61, %p62
      %p64 = scmp.ne.s32.totalorder %s53, %s56
      %p65 = scmp.eq.s32.totalorder %s22, 1
      %p66 = por %p64, %p65
      %p67 = scmp.ne.s32.totalorder %s56, %s57
      %p68 = scmp.eq.s32.totalorder %s22, 0
      %p69 = por %p67, %p68
      %p70 = scmp.ne.s32.totalorder %s56, %s57
      %p71 = scmp.eq.s32.totalorder %s23, 1
      %p72 = por %p70, %p71
      %p74 = scmp.ne.s32.totalorder %s57, %s73
      %p75 = scmp.eq.s32.totalorder %s23, 0
      %p76 = por %p74, %p75
      %s77 = ssub.s32 %s17, %s24
      %p78 = scmp.eq.s32.totalorder %s77, 0
      %s80 = sadd.s32 %s79, 1
      %s81 = scalar_select %p78, %s79, %s80
      %p84 = pneg %p78
      %p85 = scmp.eq.s32.totalorder %s17, 1
      %p86 = por %p84, %p85
      %p87 = scmp.ne.s32.totalorder %s79, %s82
      %p88 = scmp.eq.s32.totalorder %s17, 0
      %p89 = por %p87, %p88
      %p90 = scmp.ne.s32.totalorder %s79, %s82
      %p91 = scmp.eq.s32.totalorder %s22, 1
      %p92 = por %p90, %p91
      %p93 = scmp.ne.s32.totalorder %s82, %s83
      %p94 = scmp.eq.s32.totalorder %s22, 0
      %p95 = por %p93, %p94
      %p96 = scmp.ne.s32.totalorder %s82, %s83
      %p97 = scmp.eq.s32.totalorder %s23, 1
      %p98 = por %p96, %p97
      %p100 = scmp.ne.s32.totalorder %s83, %s99
      %p101 = scmp.eq.s32.totalorder %s23, 0
      %p102 = por %p100, %p101
      %p103 = scmp.le.s32.totalorder 1, %s17
      %p104 = scmp.lt.s32.totalorder %s17, 3
      %p105 = pnand %p103, %p104
      %p106 = pneg %p105
      // Predicated region
      $region9: #{tpu_custom_call.1} parent=5 // pred_check
        _
      $region10: #{tpu_custom_call.1} parent=5 // pred_check_branch
        %108 = sbr.rel (%p105) target = $region12
      $region11: #{tpu_custom_call.1} parent=5 // pred_region
        %s109 = ssub.s32 %s17, 1
      $region12: #{tpu_custom_call.1} parent=5 // pred_fallthru
        _
      %p110 = scmp.lt.s32.totalorder %s17, 2
      // Predicated region
      $region13: #{tpu_custom_call.1} parent=5 // pred_check
        %p111 = pneg %p110
      $region14: #{tpu_custom_call.1} parent=5 // pred_check_branch
        %113 = sbr.rel (%p111) target = $region16
      $region15: #{tpu_custom_call.1} parent=5 // pred_region
        // Predicated region
        $region17: #{tpu_custom_call.1} parent=15 // pred_check
          %p114 = pneg %p37
        $region18: #{tpu_custom_call.1} parent=15 // pred_check_branch
          %116 = sbr.rel (%p114) target = $region20
        $region19: #{tpu_custom_call.1} parent=15 // pred_region
          %s117 = sand.u32 %s27, 1
          %s118 = scalar_lea.sflag [#allocation3], %s117
          %s119 = sand.u32 %s27, 1
          %s120 = smul.addr %s119, 8
          %s121 = scalar_lea.vmem [#allocation2], %s120
          %s123 = ssub.s32 128, 128
          %124 = vsyncadd %s118, %s123
          %s125 = smul.addr %s17, 128
          %s126 = scalar_lea.hbm %s0, %s125
          %s128 = sshll.u32 %s121, 4
          %s129 = int_to_ptr.vmem [resolvable:$true] %s128
          %131 = dma.hbm_to_vmem [thread:$0]  %s126, 128, %s129, %s118
        $region20: #{tpu_custom_call.1} parent=15 // pred_fallthru
          _
        // Predicated region
        $region21: #{tpu_custom_call.1} parent=15 // pred_check
          %p132 = pneg %p63
        $region22: #{tpu_custom_call.1} parent=15 // pred_check_branch
          %134 = sbr.rel (%p132) target = $region24
        $region23: #{tpu_custom_call.1} parent=15 // pred_region
          %s135 = sand.u32 %s53, 1
          %s136 = scalar_lea.sflag [#allocation6], %s135
          %s137 = sand.u32 %s53, 1
          %s138 = smul.addr %s137, 8
          %s139 = scalar_lea.vmem [#allocation5], %s138
          %s141 = ssub.s32 128, 128
          %142 = vsyncadd %s136, %s141
          %s143 = smul.addr %s17, 128
          %s144 = scalar_lea.hbm %s1, %s143
          %s146 = sshll.u32 %s139, 4
          %s147 = int_to_ptr.vmem [resolvable:$true] %s146
          %149 = dma.hbm_to_vmem [thread:$0]  %s144, 128, %s147, %s136
        $region24: #{tpu_custom_call.1} parent=15 // pred_fallthru
          _
      $region16: #{tpu_custom_call.1} parent=5 // pred_fallthru
        _
      %p150 = scmp.le.s32.totalorder 1, %s17
      %p151 = scmp.lt.s32.totalorder %s17, 3
      %p152 = pnand %p150, %p151
      %p153 = pneg %p152
      // Predicated region
      $region25: #{tpu_custom_call.1} parent=5 // pred_check
        _
      $region26: #{tpu_custom_call.1} parent=5 // pred_check_branch
        %155 = sbr.rel (%p152) target = $region28
      $region27: #{tpu_custom_call.1} parent=5 // pred_region
        %s156 = ssub.s32 %s17, 1
        %s157 = sand.u32 %s30, 1
        %s158 = scalar_lea.sflag [#allocation3], %s157
        %s159 = sand.u32 %s30, 1
        %s160 = smul.addr %s159, 8
        %s161 = scalar_lea.vmem [#allocation2], %s160
        // Predicated region
        $region29: #{tpu_custom_call.1} parent=27 // pred_check
          %p162 = pneg %p43
        $region30: #{tpu_custom_call.1} parent=27 // pred_check_branch
          %164 = sbr.rel (%p162) target = $region32
        $region31: #{tpu_custom_call.1} parent=27 // pred_region
          %165 = dma.done %s158, 128
        $region32: #{tpu_custom_call.1} parent=27 // pred_fallthru
          _
        %s166 = sand.u32 %s56, 1
        %s167 = scalar_lea.sflag [#allocation6], %s166
        %s168 = sand.u32 %s56, 1
        %s169 = smul.addr %s168, 8
        %s170 = scalar_lea.vmem [#allocation5], %s169
        // Predicated region
        $region33: #{tpu_custom_call.1} parent=27 // pred_check
          %p171 = pneg %p69
        $region34: #{tpu_custom_call.1} parent=27 // pred_check_branch
          %173 = sbr.rel (%p171) target = $region36
        $region35: #{tpu_custom_call.1} parent=27 // pred_region
          %174 = dma.done %s167, 128
        $region36: #{tpu_custom_call.1} parent=27 // pred_fallthru
          _
        %s175 = sand.u32 %s30, 1
        %s176 = scalar_lea.sflag [#allocation3], %s175
        %s177 = sand.u32 %s30, 1
        %s178 = smul.addr %s177, 8
        %s179 = scalar_lea.vmem [#allocation2], %s178
        %p180 = pneg %p43
        %p181 = pneg %p40
        %s182 = sand.u32 %s56, 1
        %s183 = scalar_lea.sflag [#allocation6], %s182
        %s184 = sand.u32 %s56, 1
        %s185 = smul.addr %s184, 8
        %s186 = scalar_lea.vmem [#allocation5], %s185
        %p187 = pneg %p69
        %p188 = pneg %p66
        %p189 = pneg %p95
        %p190 = pneg %p92
        %s191 = sand.u32 %s82, 1
        %s192 = scalar_lea.sflag [#allocation4], %s191
        %s193 = sand.u32 %s82, 1
        %s194 = scalar_lea.vmem [#allocation7], %s193
        %v195 = vld [vmem:[%s161] sm:$0xff]
        %v196 = vld [vmem:[%s170] sm:$0xff]
        %v197 = vsub.f32 %v195, %v196
        %v198 = vmul.f32 %v197, %v197
        %v199 = vadd.f32 %v198, 1e-06
        %v200 = vrsqrt.pop %v199
        %v201 = vmul.f32 %v199, %v200
        %vm202 = vcmp.eq.f32.partialorder %v199, inf
        %v203 = vsel %vm202, %v199, %v201
        %vm204 = vcmp.eq.f32.partialorder %v199, 0.0
        %v205 = vand.u32 %v199, 2147483648
        %v206 = vsel %vm204, %v205, %v203
        %p207 = scmp.ne.s32.totalorder %s22, 1
        // Predicated region
        $region37: #{tpu_custom_call.1} parent=27 // pred_check
          %p208 = pneg %p207
        $region38: #{tpu_custom_call.1} parent=27 // pred_check_branch
          %210 = sbr.rel (%p208) target = $region40
        $region39: #{tpu_custom_call.1} parent=27 // pred_region
          %v211 = vadd.f32 %v206, 0.0
          %v212 = vrot.slane %v211, 4
          %v213 = vadd.f32 %v211, %v212
          %v214 = vrot.slane %v213, 2
          %v215 = vadd.f32 %v213, %v214
          %v216 = vrot.slane %v215, 1
          %v217 = vadd.f32 %v215, %v216
          %218 = vst [vmem:[%s194] sm:$0x1] %v217
        $region40: #{tpu_custom_call.1} parent=27 // pred_fallthru
          _
        %p219 = scmp.eq.s32.totalorder %s22, 1
        // Predicated region
        $region41: #{tpu_custom_call.1} parent=27 // pred_check
          %p220 = pneg %p219
        $region42: #{tpu_custom_call.1} parent=27 // pred_check_branch
          %222 = sbr.rel (%p220) target = $region44
        $region43: #{tpu_custom_call.1} parent=27 // pred_region
          %v223 = vlaneseq
          %v224 = vshrl.u32 %v223, 7
          %vm225 = vcmp.lt.s32.totalorder %v224, 8
          %v226 = vsel %vm225, %v206, 0.0
          %v227 = vadd.f32 %v226, 0.0
          %v228 = vrot.slane %v227, 4
          %v229 = vadd.f32 %v227, %v228
          %v230 = vrot.slane %v229, 2
          %v231 = vadd.f32 %v229, %v230
          %v232 = vrot.slane %v231, 1
          %v233 = vadd.f32 %v231, %v232
          %234 = vst [vmem:[%s194] sm:$0x1] %v233
        $region44: #{tpu_custom_call.1} parent=27 // pred_fallthru
          _
        %s235 = sand.u32 %s82, 1
        %s236 = scalar_lea.sflag [#allocation4], %s235
        %s237 = sand.u32 %s82, 1
        %s238 = scalar_lea.vmem [#allocation7], %s237
        // Predicated region
        $region45: #{tpu_custom_call.1} parent=27 // pred_check
          %p239 = pneg %p92
        $region46: #{tpu_custom_call.1} parent=27 // pred_check_branch
          %241 = sbr.rel (%p239) target = $region48
        $region47: #{tpu_custom_call.1} parent=27 // pred_region
          %s243 = ssub.s32 16, 16
          %244 = vsyncadd %s236, %s243
          %s245 = smul.addr %s22, 16
          %s246 = scalar_lea.hbm %s2, %s245
          %s248 = sshll.u32 %s238, 4
          %s249 = int_to_ptr.vmem [resolvable:$true] %s248
          %251 = dma.vmem_to_hbm [thread:$0]  %s249, 16, %s246, %s236
        $region48: #{tpu_custom_call.1} parent=27 // pred_fallthru
          _
      $region28: #{tpu_custom_call.1} parent=5 // pred_fallthru
        _
      %p252 = scmp.le.s32.totalorder 2, %s17
      // Predicated region
      $region49: #{tpu_custom_call.1} parent=5 // pred_check
        %p253 = pneg %p252
      $region50: #{tpu_custom_call.1} parent=5 // pred_check_branch
        %255 = sbr.rel (%p253) target = $region52
      $region51: #{tpu_custom_call.1} parent=5 // pred_region
        %s256 = ssub.s32 %s17, 2
        // Predicated region
        $region53: #{tpu_custom_call.1} parent=51 // pred_check
          %p257 = pneg %p98
        $region54: #{tpu_custom_call.1} parent=51 // pred_check_branch
          %259 = sbr.rel (%p257) target = $region56
        $region55: #{tpu_custom_call.1} parent=51 // pred_region
          %s260 = sand.u32 %s83, 1
          %s261 = scalar_lea.sflag [#allocation4], %s260
          %s262 = sand.u32 %s83, 1
          %s263 = scalar_lea.vmem [#allocation7], %s262
          %264 = dma.done %s261, 16
        $region56: #{tpu_custom_call.1} parent=51 // pred_fallthru
          _
      $region52: #{tpu_custom_call.1} parent=5 // pred_fallthru
        _
    $region6: #{tpu_custom_call.1} parent=1 // loop_footer
      %s21 = sadd.s32 1, %s17
    $region7: #{tpu_custom_call.1} parent=1 // loop_footer_branch
      %16 = sbr.rel target = $region3
    $region8: #{tpu_custom_call.1} parent=1 // loop_exit
      _
    %265 = vsyncpa [#allocation3], 1
    %s266 = scalar_lea.sflag [#allocation3], 1
    %267 = vsyncpa %s266, 1
    %268 = vsyncpa [#allocation6], 1
    %s269 = scalar_lea.sflag [#allocation6], 1
    %270 = vsyncpa %s269, 1
    %271 = vsyncpa [#allocation4], 1
    %s272 = scalar_lea.sflag [#allocation4], 1
    %273 = vsyncpa %s272, 1

</llo_original>
